<compile_context>
chip_gen: v5e
topology: v5e:2x2
jax: 0.10.0
libtpu: 0.0.40
codegen_flags: <defaults>
</compile_context>

<pallas_src>
import functools

import jax
import jax.numpy as jnp
from jax.experimental import pallas as pl
from jax.experimental.pallas import tpu as pltpu


# ----------------------------------------------------------------------------
# Kernels
# ----------------------------------------------------------------------------
def _encoder_kernel(text_ref, w1_ref, b1_ref, w2_ref, b2_ref, lat_ref, *,
                    batch, seq):
    """Text encoder: (Bp*S, Dtp) -> latent (Bp, Lp).

    text_ref : (Bp*S, Dtp) bf16      w1: (Dtp, Hp) bf16   b1: (1, Hp) f32
    w2       : (Hp, Lp)    bf16      b2: (1, Lp)   f32
    lat_ref  : (Bp, Lp)    bf16
    """
    # Single 2-D matmul over all tokens (one MXU issue instead of S tiny ones).
    h = jnp.dot(text_ref[...], w1_ref[...],
                preferred_element_type=jnp.float32)            # (Bp*S, Hp) f32
    h = jnp.maximum(h + b1_ref[...], 0.0)

    # Mean-pool over the sequence axis; (seq, Hp) = (8, 128) is a native tile.
    pooled = jnp.mean(h.reshape(batch, seq, h.shape[-1]), axis=1)   # (Bp, Hp)

    lat = jnp.dot(pooled.astype(w2_ref.dtype), w2_ref[...],
                  preferred_element_type=jnp.float32) + b2_ref[...]  # (Bp, Lp)
    lat_ref[...] = jnp.maximum(lat, 0.0).astype(lat_ref.dtype)


def _decoder_kernel(lat_ref, w3_ref, b3_ref, out_ref):
    """Image decoder tile: latent (Bp, Lp) x w3 tile (Lp, tn) -> out (Bp, tn).

    lat_ref stays resident across grid steps (constant block index); w3/b3/out
    are tiled along the flat output-feature dim.
    """
    img = jnp.dot(lat_ref[...], w3_ref[...],
                  preferred_element_type=jnp.float32)            # (Bp, tn) f32
    out_ref[...] = jnp.tanh(img + b3_ref[...]).astype(out_ref.dtype)


# ----------------------------------------------------------------------------
# Wrapper
# ----------------------------------------------------------------------------
def _round_up(x, m):
    return (x + m - 1) // m * m


def text_to_image_forward(text, params, img_shape, *, tn=512):
    """text: (B, S, Dt) float32 -> image (B, C, Hh, Ww) float32 (NCHW)."""
    B, S, Dt = text.shape
    C, Hh, Ww = img_shape
    flat = C * Hh * Ww

    w1, b1, w2, b2, w3, b3 = params
    H = w1.shape[1]
    L = w2.shape[1]

    LANE, SUB = 128, 8
    Bp = _round_up(B, SUB)            # sublane-aligned batch
    Dtp = _round_up(Dt, LANE)         # lane-aligned feature dims
    Hp = _round_up(H, LANE)
    Lp = _round_up(L, LANE)
    tn = min(tn, _round_up(flat, LANE))   # 512 default; keep <=2048 for v7x VMEM
    flat_p = _round_up(flat, tn)
    n_tiles = flat_p // tn

    bf = jnp.bfloat16

    # Zero-pad operands once in the wrapper so every block is (8,128)-dense.
    text_p = jnp.zeros((Bp, S, Dtp), bf).at[:B, :, :Dt].set(text.astype(bf))
    text2d = text_p.reshape(Bp * S, Dtp)

    w1p = jnp.zeros((Dtp, Hp), bf).at[:Dt, :H].set(w1.astype(bf))
    b1p = jnp.zeros((1, Hp), jnp.float32).at[:, :H].set(b1)
    w2p = jnp.zeros((Hp, Lp), bf).at[:H, :L].set(w2.astype(bf))
    b2p = jnp.zeros((1, Lp), jnp.float32).at[:, :L].set(b2)
    w3p = jnp.zeros((Lp, flat_p), bf).at[:L, :flat].set(w3.astype(bf))
    b3p = jnp.zeros((1, flat_p), jnp.float32).at[:, :flat].set(b3)

    vmem = pl.BlockSpec(memory_space=pltpu.MemorySpace.VMEM)
    VMEM_LIMIT = 32 * 1024 * 1024   # well under v7x's 64 MiB physical VMEM

    # ---- stage 1: text encoder (single call, everything VMEM-resident) -----
    enc_cost = pl.CostEstimate(
        flops=2 * Bp * S * Dtp * Hp + 2 * Bp * Hp * Lp,
        transcendentals=0,
        bytes_accessed=(text2d.size * 2 + w1p.size * 2 + w2p.size * 2
                        + b1p.size * 4 + b2p.size * 4 + Bp * Lp * 2),
    )
    latent = pl.pallas_call(
        functools.partial(_encoder_kernel, batch=Bp, seq=S),
        out_shape=jax.ShapeDtypeStruct((Bp, Lp), bf),
        in_specs=[vmem] * 5,
        out_specs=vmem,
        compiler_params=pltpu.CompilerParams(vmem_limit_bytes=VMEM_LIMIT),
        cost_estimate=enc_cost,
    )(text2d, w1p, b1p, w2p, b2p)

    # ---- stage 2: image decoder (gridded over the flat output dim) ---------
    dec_cost = pl.CostEstimate(
        flops=2 * Bp * Lp * flat_p,
        transcendentals=Bp * flat_p,                       # tanh
        bytes_accessed=(Bp * Lp * 2 + Lp * flat_p * 2
                        + flat_p * 4 + Bp * flat_p * 4),
    )
    out_flat = pl.pallas_call(
        _decoder_kernel,
        out_shape=jax.ShapeDtypeStruct((Bp, flat_p), jnp.float32),
        grid_spec=pltpu.PrefetchScalarGridSpec(
            num_scalar_prefetch=0,
            grid=(n_tiles,),
            in_specs=[
                pl.BlockSpec((Bp, Lp), lambda j: (0, 0)),   # latent: resident
                pl.BlockSpec((Lp, tn), lambda j: (0, j)),   # w3 tile (streamed)
                pl.BlockSpec((1, tn), lambda j: (0, j)),    # b3 tile
            ],
            out_specs=pl.BlockSpec((Bp, tn), lambda j: (0, j)),
        ),
        compiler_params=pltpu.CompilerParams(
            dimension_semantics=("parallel",),   # independent tiles -> megacore
            vmem_limit_bytes=VMEM_LIMIT,
        ),
        cost_estimate=dec_cost,
    )(latent, w3p, b3p)

    # Strip padding and reshape lane-dense slab to NCHW.
    return out_flat[:B, :flat].reshape(B, C, Hh, Ww)


# ----------------------------------------------------------------------------
# Parameters + reference
# ----------------------------------------------------------------------------
def init_params(key, d_text, hidden, latent, img_shape):
    C, Hh, Ww = img_shape
    flat = C * Hh * Ww
    k1, k2, k3, k4, k5, k6 = jax.random.split(key, 6)
    w1 = jax.random.normal(k1, (d_text, hidden), jnp.float32) / jnp.sqrt(d_text)
    b1 = 0.1 * jax.random.normal(k4, (1, hidden), jnp.float32)
    w2 = jax.random.normal(k2, (hidden, latent), jnp.float32) / jnp.sqrt(hidden)
    b2 = 0.1 * jax.random.normal(k5, (1, latent), jnp.float32)
    w3 = jax.random.normal(k3, (latent, flat), jnp.float32) / jnp.sqrt(latent)
    b3 = 0.1 * jax.random.normal(k6, (1, flat), jnp.float32)
    return (w1, b1, w2, b2, w3, b3)


def _reference_forward(text, params):
    """Pure-JAX reference mirroring the kernel's bf16-weight / f32-accumulate
    numerics (vs the pure-f32 module the only difference is bf16 rounding)."""
    w1, b1, w2, b2, w3, b3 = params
    bf = jnp.bfloat16
    B, S, Dt = text.shape
    h = jnp.dot(text.reshape(B * S, Dt).astype(bf), w1.astype(bf),
                preferred_element_type=jnp.float32) + b1
    h = jnp.maximum(h, 0.0).reshape(B, S, -1)
    pooled = jnp.mean(h, axis=1)
    lat = jnp.dot(pooled.astype(bf), w2.astype(bf),
                  preferred_element_type=jnp.float32) + b2
    lat = jnp.maximum(lat, 0.0)
    img = jnp.dot(lat.astype(bf), w3.astype(bf),
                  preferred_element_type=jnp.float32) + b3
    return jnp.tanh(img)


# ----------------------------------------------------------------------------
if __name__ == "__main__":
    # Small shapes consistent with the module's forward:
    #   text_tensor -> latent -> generated image (NCHW)
    B, S, D_TEXT = 2, 8, 32          # batch, sequence length, token feature dim
    HIDDEN, LATENT = 64, 32
    IMG_SHAPE = (4, 16, 16)          # (C, H, W)

    key = jax.random.PRNGKey(0)
    k_text, k_params = jax.random.split(key)

    text = jax.random.normal(k_text, (B, S, D_TEXT), jnp.float32)
    params = init_params(k_params, D_TEXT, HIDDEN, LATENT, IMG_SHAPE)

    img = text_to_image_forward(text, params, IMG_SHAPE)
    img = jax.block_until_ready(img)

    # sanity: shape + numerics vs pure-JAX reference (bf16-matched)
    assert img.shape == (B,) + IMG_SHAPE, img.shape
    ref = _reference_forward(text, params).reshape(B, *IMG_SHAPE)
    max_err = float(jnp.max(jnp.abs(img - ref)))
    assert jnp.allclose(img, ref, atol=2e-2, rtol=2e-2), f"mismatch: {max_err}"

    # TODO(synk): real pretrained text_encoder / image_decoder weights are
    # checkpoint loads (torch.load) in the original code and cannot be
    # reproduced here; synthetic weights stand in with identical data flow.
    print("KERNEL_OK")
</pallas_src>

<mosaic_0001>
module attributes {stable_mosaic.version = 11 : i64} {
  func.func @_encoder_kernel(%arg0: memref<64x128xbf16, #tpu.memory_space<vmem>>, %arg1: memref<128x128xbf16, #tpu.memory_space<vmem>>, %arg2: memref<1x128xf32, #tpu.memory_space<vmem>>, %arg3: memref<128x128xbf16, #tpu.memory_space<vmem>>, %arg4: memref<1x128xf32, #tpu.memory_space<vmem>>, %arg5: memref<8x128xbf16, #tpu.memory_space<vmem>>) attributes {dimension_semantics = [], scalar_prefetch = 0 : i64, scratch_operands = 0 : i64, tpu.core_type = #tpu.core_type<tc>} {
    %c0 = arith.constant 0 : index
    %c0_0 = arith.constant 0 : index
    %0 = vector.load %arg0[%c0, %c0_0] : memref<64x128xbf16, #tpu.memory_space<vmem>>, vector<64x128xbf16>
    %c0_1 = arith.constant 0 : index
    %c0_2 = arith.constant 0 : index
    %1 = vector.load %arg1[%c0_1, %c0_2] : memref<128x128xbf16, #tpu.memory_space<vmem>>, vector<128x128xbf16>
    %cst = arith.constant dense<0.000000e+00> : vector<64x128xf32>
    %2 = tpu.matmul %0, %1, %cst {dimension_numbers = #tpu.dot_dimension_numbers<[1], [0], [0], [1], [0, 0, 1, 1], [], []>} : vector<64x128xbf16>, vector<128x128xbf16>, vector<64x128xf32> -> vector<64x128xf32>
    %c0_3 = arith.constant 0 : index
    %c0_4 = arith.constant 0 : index
    %3 = vector.load %arg2[%c0_3, %c0_4] : memref<1x128xf32, #tpu.memory_space<vmem>>, vector<1x128xf32>
    %4 = vector.broadcast %3 : vector<1x128xf32> to vector<64x128xf32>
    %5 = arith.addf %2, %4 : vector<64x128xf32>
    %cst_5 = arith.constant 0.000000e+00 : f32
    %6 = vector.broadcast %cst_5 : f32 to vector<64x128xf32>
    %7 = arith.maximumf %5, %6 : vector<64x128xf32>
    %8 = vector.shape_cast %7 : vector<64x128xf32> to vector<8x8x128xf32>
    %cst_6 = arith.constant dense<0.000000e+00> : vector<8x128xf32>
    %9 = vector.multi_reduction <add>, %8, %cst_6 [1] : vector<8x8x128xf32> to vector<8x128xf32>
    %cst_7 = arith.constant 8.000000e+00 : f32
    %10 = vector.broadcast %cst_7 : f32 to vector<8x128xf32>
    %11 = arith.divf %9, %10 : vector<8x128xf32>
    %12 = arith.truncf %11 : vector<8x128xf32> to vector<8x128xbf16>
    %c0_8 = arith.constant 0 : index
    %c0_9 = arith.constant 0 : index
    %13 = vector.load %arg3[%c0_8, %c0_9] : memref<128x128xbf16, #tpu.memory_space<vmem>>, vector<128x128xbf16>
    %cst_10 = arith.constant dense<0.000000e+00> : vector<8x128xf32>
    %14 = tpu.matmul %12, %13, %cst_10 {dimension_numbers = #tpu.dot_dimension_numbers<[1], [0], [0], [1], [0, 0, 1, 1], [], []>} : vector<8x128xbf16>, vector<128x128xbf16>, vector<8x128xf32> -> vector<8x128xf32>
    %c0_11 = arith.constant 0 : index
    %c0_12 = arith.constant 0 : index
    %15 = vector.load %arg4[%c0_11, %c0_12] : memref<1x128xf32, #tpu.memory_space<vmem>>, vector<1x128xf32>
    %16 = vector.broadcast %15 : vector<1x128xf32> to vector<8x128xf32>
    %17 = arith.addf %14, %16 : vector<8x128xf32>
    %cst_13 = arith.constant 0.000000e+00 : f32
    %18 = vector.broadcast %cst_13 : f32 to vector<8x128xf32>
    %19 = arith.maximumf %17, %18 : vector<8x128xf32>
    %20 = arith.truncf %19 : vector<8x128xf32> to vector<8x128xbf16>
    %c0_14 = arith.constant 0 : index
    %c0_15 = arith.constant 0 : index
    %21 = vector.load %arg5[%c0_14, %c0_15] : memref<8x128xbf16, #tpu.memory_space<vmem>>, vector<8x128xbf16>
    tpu.vector_store %arg5[%c0_14, %c0_15], %20 {strides = array<i32>} : memref<8x128xbf16, #tpu.memory_space<vmem>>, vector<8x128xbf16>,
    return
  }
}

</mosaic_0001>

<llo_original>
// kernel: tpu_custom_call.1
$region0: #{tpu_custom_call.1}
  #allocation0 [shape = 'u32[]', space=smem, size = 0x4, offset = 0x4, fixed_abs, tag = 'smem constant byte address 0x4 - core index']
  #allocation1 [shape = 'u32[72,128]{1,0:T(1,128)}', space=vmem, size = 0x9000, scoped, tag = 'internal scratch']
  %s0 = inlined_call_operand.hbm [shape: bf16[64,128], index: 0, kind: input, shape index: {}]
  %s1 = inlined_call_operand.hbm [shape: bf16[128,128], index: 1, kind: input, shape index: {}]
  %s2 = inlined_call_operand.vmem [shape: f32[1,128], index: 2, kind: input, shape index: {}]
  %s3 = inlined_call_operand.hbm [shape: bf16[128,128], index: 3, kind: input, shape index: {}]
  %s4 = inlined_call_operand.vmem [shape: f32[1,128], index: 4, kind: input, shape index: {}]
  %s5 = inlined_call_operand.hbm [shape: bf16[8,128], index: 5, kind: output, shape index: {}]
  %s6 = sld [smem:[#allocation0]]
  $region42: #{tpu_custom_call.1} parent=0
    _
  %s8 = ssub.s32 1, %s6
  %s9 = scalar_select 0, %s8, %s6
  $region1: #{tpu_custom_call.1} parent=0
    #allocation2 [shape = 'u8[16384]{0}', space=vmem, size = 0x4000, scoped, tag = 'input window, operand 0, single buffered']
    #allocation3 [shape = 's32[1]{0}', space=sflag, size = 0x4, scoped, tag = 'scoped memory for tpu_custom_call.1']
    #allocation4 [shape = 's32[1]{0}', space=sflag, size = 0x4, scoped, tag = 'scoped memory for tpu_custom_call.1']
    #allocation5 [shape = 'u8[32768]{0}', space=vmem, size = 0x8000, scoped, tag = 'input window, operand 1, single buffered']
    #allocation6 [shape = 's32[1]{0}', space=sflag, size = 0x4, scoped, tag = 'scoped memory for tpu_custom_call.1']
    #allocation7 [shape = 'u8[32768]{0}', space=vmem, size = 0x8000, scoped, tag = 'input window, operand 3, single buffered']
    #allocation8 [shape = 'u8[2048]{0}', space=vmem, size = 0x800, scoped, tag = 'output window, operand 0, single buffered']
    %10 = vsyncpa [#allocation3], 0
    %11 = vsyncpa [#allocation6], 0
    %12 = vsyncpa [#allocation4], 0
    // Predicated region
    $region2: #{tpu_custom_call.1} parent=1 // pred_check
      _
    $region3: #{tpu_custom_call.1} parent=1 // pred_check_branch
      %14 = sbr.rel (0) target = $region5
    $region4: #{tpu_custom_call.1} parent=1 // pred_region
      %16 = vsyncadd [#allocation3], 0
      %s17 = sshll.u32 %s0, 4
      %s18 = int_to_ptr.hbm [resolvable:$true] %s17
      %s19 = sshll.u32 [#allocation2], 4
      %s20 = int_to_ptr.vmem [resolvable:$true] %s19
      %25 = dma.hbm_to_vmem [thread:$0]  %s18, 512, %s20, [#allocation3], 64, 64, 4
    $region5: #{tpu_custom_call.1} parent=1 // pred_fallthru
      _
    // Predicated region
    $region6: #{tpu_custom_call.1} parent=1 // pred_check
      _
    $region7: #{tpu_custom_call.1} parent=1 // pred_check_branch
      %27 = sbr.rel (0) target = $region9
    $region8: #{tpu_custom_call.1} parent=1 // pred_region
      %29 = vsyncadd [#allocation6], 0
      %s30 = sshll.u32 %s1, 4
      %s31 = int_to_ptr.hbm [resolvable:$true] %s30
      %s32 = sshll.u32 [#allocation5], 4
      %s33 = int_to_ptr.vmem [resolvable:$true] %s32
      %38 = dma.hbm_to_vmem [thread:$0]  %s31, 1024, %s33, [#allocation6], 64, 64, 4
    $region9: #{tpu_custom_call.1} parent=1 // pred_fallthru
      _
    // Predicated region
    $region10: #{tpu_custom_call.1} parent=1 // pred_check
      _
    $region11: #{tpu_custom_call.1} parent=1 // pred_check_branch
      %40 = sbr.rel (0) target = $region13
    $region12: #{tpu_custom_call.1} parent=1 // pred_region
      _
    $region13: #{tpu_custom_call.1} parent=1 // pred_fallthru
      _
    // Predicated region
    $region14: #{tpu_custom_call.1} parent=1 // pred_check
      _
    $region15: #{tpu_custom_call.1} parent=1 // pred_check_branch
      %42 = sbr.rel (0) target = $region17
    $region16: #{tpu_custom_call.1} parent=1 // pred_region
      %44 = vsyncadd [#allocation6], 0
      %s45 = sshll.u32 %s3, 4
      %s46 = int_to_ptr.hbm [resolvable:$true] %s45
      %s47 = sshll.u32 [#allocation7], 4
      %s48 = int_to_ptr.vmem [resolvable:$true] %s47
      %53 = dma.hbm_to_vmem [thread:$0]  %s46, 1024, %s48, [#allocation6], 64, 64, 4
    $region17: #{tpu_custom_call.1} parent=1 // pred_fallthru
      _
    // Predicated region
    $region18: #{tpu_custom_call.1} parent=1 // pred_check
      _
    $region19: #{tpu_custom_call.1} parent=1 // pred_check_branch
      %55 = sbr.rel (0) target = $region21
    $region20: #{tpu_custom_call.1} parent=1 // pred_region
      _
    $region21: #{tpu_custom_call.1} parent=1 // pred_fallthru
      _
    // Predicated region
    $region22: #{tpu_custom_call.1} parent=1 // pred_check
      _
    $region23: #{tpu_custom_call.1} parent=1 // pred_check_branch
      %57 = sbr.rel (0) target = $region25
    $region24: #{tpu_custom_call.1} parent=1 // pred_region
      %59 = dma.done [#allocation3], 512
    $region25: #{tpu_custom_call.1} parent=1 // pred_fallthru
      _
    // Predicated region
    $region26: #{tpu_custom_call.1} parent=1 // pred_check
      _
    $region27: #{tpu_custom_call.1} parent=1 // pred_check_branch
      %61 = sbr.rel (0) target = $region29
    $region28: #{tpu_custom_call.1} parent=1 // pred_region
      %63 = dma.done [#allocation6], 1024
    $region29: #{tpu_custom_call.1} parent=1 // pred_fallthru
      _
    // Predicated region
    $region30: #{tpu_custom_call.1} parent=1 // pred_check
      _
    $region31: #{tpu_custom_call.1} parent=1 // pred_check_branch
      %65 = sbr.rel (0) target = $region33
    $region32: #{tpu_custom_call.1} parent=1 // pred_region
      %67 = dma.done [#allocation6], 1024
    $region33: #{tpu_custom_call.1} parent=1 // pred_fallthru
      _
    %v68 = vld [vmem:[#allocation2] sm:$0xf]
    %v69 = vld [vmem:[#allocation2 + $0x4] sm:$0xf]
    %v70 = vld [vmem:[#allocation2 + $0x8] sm:$0xf]
    %v71 = vld [vmem:[#allocation2 + $0xc] sm:$0xf]
    %v72 = vld [vmem:[#allocation2 + $0x10] sm:$0xf]
    %v73 = vld [vmem:[#allocation2 + $0x14] sm:$0xf]
    %v74 = vld [vmem:[#allocation2 + $0x18] sm:$0xf]
    %v75 = vld [vmem:[#allocation2 + $0x1c] sm:$0xf]
    %v76 = vld [vmem:[#allocation5] sm:$0xf]
    %v77 = vld [vmem:[#allocation5 + $0x4] sm:$0xf]
    %v78 = vld [vmem:[#allocation5 + $0x8] sm:$0xf]
    %v79 = vld [vmem:[#allocation5 + $0xc] sm:$0xf]
    %v80 = vld [vmem:[#allocation5 + $0x10] sm:$0xf]
    %v81 = vld [vmem:[#allocation5 + $0x14] sm:$0xf]
    %v82 = vld [vmem:[#allocation5 + $0x18] sm:$0xf]
    %v83 = vld [vmem:[#allocation5 + $0x1c] sm:$0xf]
    %v84 = vld [vmem:[#allocation5 + $0x20] sm:$0xf]
    %v85 = vld [vmem:[#allocation5 + $0x24] sm:$0xf]
    %v86 = vld [vmem:[#allocation5 + $0x28] sm:$0xf]
    %v87 = vld [vmem:[#allocation5 + $0x2c] sm:$0xf]
    %v88 = vld [vmem:[#allocation5 + $0x30] sm:$0xf]
    %v89 = vld [vmem:[#allocation5 + $0x34] sm:$0xf]
    %v90 = vld [vmem:[#allocation5 + $0x38] sm:$0xf]
    %v91 = vld [vmem:[#allocation5 + $0x3c] sm:$0xf]
    %v92 = vld [vmem:[%s2] sm:$0x1]
    %v94 = vperm.slane %v92, 0
    %v104 = vunpack.c.l.b16 %v68
    %v105 = vunpack.c.l.b16 %v69
    %v106 = vunpack.c.l.b16 %v70
    %v107 = vunpack.c.l.b16 %v71
    %v108 = vunpack.c.l.b16 %v72
    %v109 = vunpack.c.l.b16 %v73
    %v110 = vunpack.c.l.b16 %v74
    %v111 = vunpack.c.l.b16 %v75
    %v112 = vpack.c.b16 %v105, %v104
    %v113 = vpack.c.b16 %v107, %v106
    %v114 = vpack.c.b16 %v109, %v108
    %v115 = vpack.c.b16 %v111, %v110
    %v136 = vunpack.c.l.b16 %v76
    %v137 = vunpack.c.l.b16 %v77
    %v138 = vunpack.c.l.b16 %v78
    %v139 = vunpack.c.l.b16 %v79
    %v140 = vunpack.c.l.b16 %v80
    %v141 = vunpack.c.l.b16 %v81
    %v142 = vunpack.c.l.b16 %v82
    %v143 = vunpack.c.l.b16 %v83
    %v144 = vunpack.c.l.b16 %v84
    %v145 = vunpack.c.l.b16 %v85
    %v146 = vunpack.c.l.b16 %v86
    %v147 = vunpack.c.l.b16 %v87
    %v148 = vunpack.c.l.b16 %v88
    %v149 = vunpack.c.l.b16 %v89
    %v150 = vunpack.c.l.b16 %v90
    %v151 = vunpack.c.l.b16 %v91
    %v152 = vpack.c.b16 %v137, %v136
    %v153 = vpack.c.b16 %v139, %v138
    %v154 = vpack.c.b16 %v141, %v140
    %v155 = vpack.c.b16 %v143, %v142
    %v156 = vpack.c.b16 %v145, %v144
    %v157 = vpack.c.b16 %v147, %v146
    %v158 = vpack.c.b16 %v149, %v148
    %v159 = vpack.c.b16 %v151, %v150
    %168 = vmatpush.bf16.msra.mxu0 %v159
    %169 = vmatpush.bf16.msra.mxu0 %v158
    %170 = vmatpush.bf16.msra.mxu0 %v157
    %171 = vmatpush.bf16.msra.mxu0 %v156
    %172 = vmatpush.bf16.msra.mxu0 %v155
    %173 = vmatpush.bf16.msra.mxu0 %v154
    %174 = vmatpush.bf16.msra.mxu0 %v153
    %175 = vmatpush.bf16.msra.mxu0 %v152
    %176 = vmatmul.bf16.gmra.mxu0 %v112
    %v177 = vpop.f32.mrf.mxu0
    %v178 = vadd.f32 %v94, %v177
    %v179 = vpop.f32.mrf.mxu0
    %v180 = vadd.f32 %v94, %v179
    %181 = vmatmul.bf16.gmra.mxu0 %v113
    %v182 = vpop.f32.mrf.mxu0
    %v183 = vadd.f32 %v94, %v182
    %v184 = vpop.f32.mrf.mxu0
    %v185 = vadd.f32 %v94, %v184
    %186 = vmatmul.bf16.gmra.mxu0 %v114
    %v187 = vpop.f32.mrf.mxu0
    %v188 = vadd.f32 %v94, %v187
    %v189 = vpop.f32.mrf.mxu0
    %v190 = vadd.f32 %v94, %v189
    %191 = vmatmul.bf16.gmra.mxu0 %v115
    %v192 = vpop.f32.mrf.mxu0
    %v193 = vadd.f32 %v94, %v192
    %v194 = vpop.f32.mrf.mxu0
    %v195 = vadd.f32 %v94, %v194
    %196 = vdwg.mxu0
    %v197 = vmax.f32 %v178, 0.0
    %v198 = vmax.f32 %v180, 0.0
    %v199 = vmax.f32 %v183, 0.0
    %v200 = vmax.f32 %v185, 0.0
    %v201 = vmax.f32 %v188, 0.0
    %v202 = vmax.f32 %v190, 0.0
    %v203 = vmax.f32 %v193, 0.0
    %v204 = vmax.f32 %v195, 0.0
    %v205 = vrot.slane %v197, 4
    %v206 = vadd.f32 %v197, %v205
    %v207 = vrot.slane %v206, 2
    %v208 = vadd.f32 %v206, %v207
    %v209 = vrot.slane %v208, 1
    %v210 = vadd.f32 %v208, %v209
    %v211 = vrot.slane %v198, 4
    %v212 = vadd.f32 %v198, %v211
    %v213 = vrot.slane %v212, 2
    %v214 = vadd.f32 %v212, %v213
    %v215 = vrot.slane %v214, 1
    %v216 = vadd.f32 %v214, %v215
    %v217 = vrot.slane %v199, 4
    %v218 = vadd.f32 %v199, %v217
    %v219 = vrot.slane %v218, 2
    %v220 = vadd.f32 %v218, %v219
    %v221 = vrot.slane %v220, 1
    %v222 = vadd.f32 %v220, %v221
    %v223 = vrot.slane %v200, 4
    %v224 = vadd.f32 %v200, %v223
    %v225 = vrot.slane %v224, 2
    %v226 = vadd.f32 %v224, %v225
    %v227 = vrot.slane %v226, 1
    %v228 = vadd.f32 %v226, %v227
    %v229 = vrot.slane %v201, 4
    %v230 = vadd.f32 %v201, %v229
    %v231 = vrot.slane %v230, 2
    %v232 = vadd.f32 %v230, %v231
    %v233 = vrot.slane %v232, 1
    %v234 = vadd.f32 %v232, %v233
    %v235 = vrot.slane %v202, 4
    %v236 = vadd.f32 %v202, %v235
    %v237 = vrot.slane %v236, 2
    %v238 = vadd.f32 %v236, %v237
    %v239 = vrot.slane %v238, 1
    %v240 = vadd.f32 %v238, %v239
    %v241 = vrot.slane %v203, 4
    %v242 = vadd.f32 %v203, %v241
    %v243 = vrot.slane %v242, 2
    %v244 = vadd.f32 %v242, %v243
    %v245 = vrot.slane %v244, 1
    %v246 = vadd.f32 %v244, %v245
    %v247 = vrot.slane %v204, 4
    %v248 = vadd.f32 %v204, %v247
    %v249 = vrot.slane %v248, 2
    %v250 = vadd.f32 %v248, %v249
    %v251 = vrot.slane %v250, 1
    %v252 = vadd.f32 %v250, %v251
    %v253 = vrcp.pop 8.0
    %v254 = vmul.f32 8.0, %v253
    %v255 = vsub.f32 1.0, %v254
    %v256 = vmul.f32 %v253, %v255
    %v257 = vadd.f32 %v253, %v256
    %vm258 = vweird.f32 %v253
    %v259 = vsel %vm258, %v253, %v257
    %v260 = vmul.f32 %v210, %v259
    %v261 = vmul.f32 %v216, %v259
    %v262 = vmul.f32 %v222, %v259
    %v263 = vmul.f32 %v228, %v259
    %v264 = vmul.f32 %v234, %v259
    %v265 = vmul.f32 %v240, %v259
    %v266 = vmul.f32 %v246, %v259
    %v267 = vmul.f32 %v252, %v259
    %v268 = vpack.c.bf16 %v260, %v260
    %v269 = vpack.c.bf16 %v261, %v261
    %v270 = vpack.c.bf16 %v262, %v262
    %v271 = vpack.c.bf16 %v263, %v263
    %v272 = vpack.c.bf16 %v264, %v264
    %v273 = vpack.c.bf16 %v265, %v265
    %v274 = vpack.c.bf16 %v266, %v266
    %v275 = vpack.c.bf16 %v267, %v267
    %v276 = vld [vmem:[#allocation7] sm:$0xf]
    %v277 = vld [vmem:[#allocation7 + $0x4] sm:$0xf]
    %v278 = vld [vmem:[#allocation7 + $0x8] sm:$0xf]
    %v279 = vld [vmem:[#allocation7 + $0xc] sm:$0xf]
    %v280 = vld [vmem:[#allocation7 + $0x10] sm:$0xf]
    %v281 = vld [vmem:[#allocation7 + $0x14] sm:$0xf]
    %v282 = vld [vmem:[#allocation7 + $0x18] sm:$0xf]
    %v283 = vld [vmem:[#allocation7 + $0x1c] sm:$0xf]
    %v284 = vld [vmem:[#allocation7 + $0x20] sm:$0xf]
    %v285 = vld [vmem:[#allocation7 + $0x24] sm:$0xf]
    %v286 = vld [vmem:[#allocation7 + $0x28] sm:$0xf]
    %v287 = vld [vmem:[#allocation7 + $0x2c] sm:$0xf]
    %v288 = vld [vmem:[#allocation7 + $0x30] sm:$0xf]
    %v289 = vld [vmem:[#allocation7 + $0x34] sm:$0xf]
    %v290 = vld [vmem:[#allocation7 + $0x38] sm:$0xf]
    %v291 = vld [vmem:[#allocation7 + $0x3c] sm:$0xf]
    %v292 = vld [vmem:[%s4] sm:$0x1]
    %v294 = vperm.slane %v292, 0
    %v304 = vunpack.c.l.b16 %v268
    %v305 = vunpack.c.l.b16 %v269
    %v306 = vunpack.c.l.b16 %v270
    %v307 = vunpack.c.l.b16 %v271
    %v308 = vunpack.c.l.b16 %v272
    %v309 = vunpack.c.l.b16 %v273
    %v310 = vunpack.c.l.b16 %v274
    %v311 = vunpack.c.l.b16 %v275
    %vm312 = vcmask 1041409
    %v313 = vsel %vm312, %v305, %v304
    %vm314 = vcmask 1042434
    %v315 = vsel %vm314, %v306, %v313
    %vm316 = vcmask 1043459
    %v317 = vsel %vm316, %v307, %v315
    %vm318 = vcmask 1044484
    %v319 = vsel %vm318, %v308, %v317
    %vm320 = vcmask 1045509
    %v321 = vsel %vm320, %v309, %v319
    %vm322 = vcmask 1046534
    %v323 = vsel %vm322, %v310, %v321
    %vm324 = vcmask 1047559
    %v325 = vsel %vm324, %v311, %v323
    %v326 = vpack.c.b16 %v325, %v325
    %v344 = vunpack.c.l.b16 %v276
    %v345 = vunpack.c.l.b16 %v277
    %v346 = vunpack.c.l.b16 %v278
    %v347 = vunpack.c.l.b16 %v279
    %v348 = vunpack.c.l.b16 %v280
    %v349 = vunpack.c.l.b16 %v281
    %v350 = vunpack.c.l.b16 %v282
    %v351 = vunpack.c.l.b16 %v283
    %v352 = vunpack.c.l.b16 %v284
    %v353 = vunpack.c.l.b16 %v285
    %v354 = vunpack.c.l.b16 %v286
    %v355 = vunpack.c.l.b16 %v287
    %v356 = vunpack.c.l.b16 %v288
    %v357 = vunpack.c.l.b16 %v289
    %v358 = vunpack.c.l.b16 %v290
    %v359 = vunpack.c.l.b16 %v291
    %v360 = vpack.c.b16 %v345, %v344
    %v361 = vpack.c.b16 %v347, %v346
    %v362 = vpack.c.b16 %v349, %v348
    %v363 = vpack.c.b16 %v351, %v350
    %v364 = vpack.c.b16 %v353, %v352
    %v365 = vpack.c.b16 %v355, %v354
    %v366 = vpack.c.b16 %v357, %v356
    %v367 = vpack.c.b16 %v359, %v358
    %376 = vmatpush.bf16.msra.mxu0 %v367
    %377 = vmatpush.bf16.msra.mxu0 %v366
    %378 = vmatpush.bf16.msra.mxu0 %v365
    %379 = vmatpush.bf16.msra.mxu0 %v364
    %380 = vmatpush.bf16.msra.mxu0 %v363
    %381 = vmatpush.bf16.msra.mxu0 %v362
    %382 = vmatpush.bf16.msra.mxu0 %v361
    %383 = vmatpush.bf16.msra.mxu0 %v360
    %384 = vmatmul.bf16.gmra.mxu0 %v326
    %v385 = vpop.f32.mrf.mxu0
    %v386 = vadd.f32 %v294, %v385
    %v387 = vpop.f32.mrf.mxu0
    %388 = vdwg.mxu0
    %v389 = vmax.f32 %v386, 0.0
    %v390 = vpack.c.bf16 %v389, %v389
    %391 = vst [vmem:[#allocation8] sm:$0xf] %v390
    // Predicated region
    $region34: #{tpu_custom_call.1} parent=1 // pred_check
      _
    $region35: #{tpu_custom_call.1} parent=1 // pred_check_branch
      %393 = sbr.rel (0) target = $region37
    $region36: #{tpu_custom_call.1} parent=1 // pred_region
      %395 = vsyncadd [#allocation4], 0
      %s397 = sshll.u32 [#allocation8], 4
      %s398 = int_to_ptr.vmem [resolvable:$true] %s397
      %s399 = sshll.u32 %s5, 4
      %s400 = int_to_ptr.hbm [resolvable:$true] %s399
      %402 = dma.vmem_to_hbm [thread:$0]  %s398, 64, %s400, [#allocation4]
    $region37: #{tpu_custom_call.1} parent=1 // pred_fallthru
      _
    // Predicated region
    $region38: #{tpu_custom_call.1} parent=1 // pred_check
      _
    $region39: #{tpu_custom_call.1} parent=1 // pred_check_branch
      %404 = sbr.rel (0) target = $region41
    $region40: #{tpu_custom_call.1} parent=1 // pred_region
      %406 = dma.done [#allocation4], 64
    $region41: #{tpu_custom_call.1} parent=1 // pred_fallthru
      _
    %407 = vsyncpa [#allocation3], 1
    %408 = vsyncpa [#allocation6], 1
    %409 = vsyncpa [#allocation4], 1

</llo_original>
